<compile_context>
chip_gen: v7x
topology: tpu7x:2x2x1
jax: 0.10.0
libtpu: 0.0.40
codegen_flags: <defaults>
</compile_context>

<pallas_src>
import math
import jax
import jax.numpy as jnp
from jax import lax
from jax.experimental import pallas as pl
from jax.experimental.pallas import tpu as pltpu


# --------------------------------------------------------------------------- #
# Tiled linear projection:  y = x @ w_t   (w_t is pre-transposed, (in, out))
# --------------------------------------------------------------------------- #

def _linear_kernel(x_ref, w_ref, o_ref, acc_ref):
    @pl.when(pl.program_id(2) == 0)
    def _():
        acc_ref[...] = jnp.zeros_like(acc_ref)

    acc_ref[...] += jnp.dot(x_ref[...], w_ref[...],
                            preferred_element_type=jnp.float32)

    @pl.when(pl.program_id(2) == pl.num_programs(2) - 1)
    def _():
        o_ref[...] = acc_ref[...].astype(o_ref.dtype)


def _fit_tile(dim, target, align):
    """Largest tile <= target that divides dim, preferring multiples of align."""
    if dim <= target:
        return dim
    t = (target // align) * align
    while t >= align:
        if dim % t == 0:
            return t
        t -= align
    for t in range(min(target, dim), 0, -1):
        if dim % t == 0:
            return t
    return dim


def pallas_linear(x2d, w_t, *, tm=256, tn=256, tk=512):
    M, K = x2d.shape
    K2, N = w_t.shape
    assert K == K2
    tm = _fit_tile(M, tm, 8)
    tn = _fit_tile(N, tn, 128)
    tk = _fit_tile(K, tk, 128)
    grid = (M // tm, N // tn, K // tk)
    return pl.pallas_call(
        _linear_kernel,
        out_shape=jax.ShapeDtypeStruct((M, N), x2d.dtype),
        grid_spec=pltpu.PrefetchScalarGridSpec(
            num_scalar_prefetch=0,
            grid=grid,
            in_specs=[pl.BlockSpec((tm, tk), lambda i, j, k: (i, k)),
                      pl.BlockSpec((tk, tn), lambda i, j, k: (k, j))],
            out_specs=pl.BlockSpec((tm, tn), lambda i, j, k: (i, j)),
            scratch_shapes=[pltpu.VMEM((tm, tn), jnp.float32)]),
        compiler_params=pltpu.CompilerParams(
            dimension_semantics=("parallel", "parallel", "arbitrary"),
            vmem_limit_bytes=32 * 1024 * 1024),
    )(x2d, w_t)


# --------------------------------------------------------------------------- #
# Flash-style causal attention with fused RoPE (online softmax, tile skipping)
# --------------------------------------------------------------------------- #

def _flash_attn_kernel(q_ref, k_ref, v_ref, cq_ref, sq_ref, ck_ref, sk_ref,
                       o_ref, m_ref, l_ref, acc_ref):
    _, tq, D = q_ref.shape
    _, tkv, _ = k_ref.shape
    half = D // 2

    qi = pl.program_id(2)
    ki = pl.program_id(3)
    nk = pl.num_programs(3)
    q_start = qi * tq
    kv_start = ki * tkv

    @pl.when(ki == 0)
    def _():
        m_ref[...] = jnp.full_like(m_ref, -jnp.inf)
        l_ref[...] = jnp.zeros_like(l_ref)
        acc_ref[...] = jnp.zeros_like(acc_ref)

    # Skip kv tiles entirely above the causal diagonal for this q tile.
    # (Their K/V DMAs are also elided by the clamped kv index_map.)
    @pl.when(kv_start < q_start + tq)
    def _():
        q = q_ref[0].astype(jnp.float32)          # (tq, D), columns = [r... | i...]
        k = k_ref[0].astype(jnp.float32)          # (tkv, D)
        cq = cq_ref[...]                          # (tq, half), includes 1/sqrt(D)
        sq = sq_ref[...]
        ck = ck_ref[...]                          # (tkv, half)
        sk = sk_ref[...]

        # Rotate-half RoPE on the permuted layout (permutation baked into wq/wk
        # rows at init, applied identically to q and k so QK^T is unchanged).
        q_r, q_i = q[:, :half], q[:, half:]
        k_r, k_i = k[:, :half], k[:, half:]
        q_rot = jnp.concatenate([q_r * cq - q_i * sq, q_r * sq + q_i * cq], axis=-1)
        k_rot = jnp.concatenate([k_r * ck - k_i * sk, k_r * sk + k_i * ck], axis=-1)

        # Single K=D contraction on the last dims (no materialized k transpose),
        # operands in the input dtype (bf16 stays bf16), f32 accumulation.
        s = lax.dot_general(q_rot.astype(q_ref.dtype), k_rot.astype(k_ref.dtype),
                            (((1,), (1,)), ((), ())),
                            preferred_element_type=jnp.float32)      # (tq, tkv)

        row = q_start + lax.broadcasted_iota(jnp.int32, (tq, tkv), 0)
        col = kv_start + lax.broadcasted_iota(jnp.int32, (tq, tkv), 1)
        s = jnp.where(col <= row, s, -jnp.inf)

        m_prev = m_ref[...][:, 0:1]                                   # (tq, 1)
        l_prev = l_ref[...][:, 0:1]
        m_cur = jnp.max(s, axis=-1, keepdims=True)
        m_next = jnp.maximum(m_prev, m_cur)
        alpha = jnp.exp(m_prev - m_next)
        p = jnp.exp(s - m_next)                                       # (tq, tkv)
        l_next = alpha * l_prev + jnp.sum(p, axis=-1, keepdims=True)

        m_ref[...] = jnp.broadcast_to(m_next, m_ref.shape)
        l_ref[...] = jnp.broadcast_to(l_next, l_ref.shape)
        acc_ref[...] = acc_ref[...] * alpha + jnp.dot(
            p.astype(v_ref.dtype), v_ref[0], preferred_element_type=jnp.float32)

    @pl.when(ki == nk - 1)
    def _():
        inv_l = pl.reciprocal(l_ref[...][:, 0:1], approx=True)        # EUP slot
        o_ref[0] = (acc_ref[...] * inv_l).astype(o_ref.dtype)


def pallas_flash_attention(xq, xk, xv, cos_q, sin_q, cos_k, sin_k,
                           *, n_heads, n_rep, head_dim, tq=128, tkv=128):
    """xq: (B, S, H*D); xk/xv: (B, S, KVH*D); cos/sin: (S, D//2). Returns (B, S, H*D)."""
    B, S, _ = xq.shape
    D = head_dim
    half = D // 2
    tq = _fit_tile(S, tq, 128)
    tkv = _fit_tile(S, tkv, 128)
    nq, nk = S // tq, S // tkv
    grid = (B, n_heads, nq, nk)

    def q_map(b, h, qi, ki):
        return (b, qi, h)

    def kv_map(b, h, qi, ki):
        # Clamp skipped (fully-masked) kv tiles to the last useful one so the
        # pipeline does not issue a fresh DMA for them.
        last = ((qi + 1) * tq - 1) // tkv
        return (b, jnp.minimum(ki, last), h // n_rep)

    def cq_map(b, h, qi, ki):
        return (qi, 0)

    def ck_map(b, h, qi, ki):
        last = ((qi + 1) * tq - 1) // tkv
        return (jnp.minimum(ki, last), 0)

    def o_map(b, h, qi, ki):
        return (b, qi, h)

    return pl.pallas_call(
        _flash_attn_kernel,
        out_shape=jax.ShapeDtypeStruct((B, S, n_heads * D), xq.dtype),
        grid_spec=pltpu.PrefetchScalarGridSpec(
            num_scalar_prefetch=0,
            grid=grid,
            in_specs=[
                pl.BlockSpec((1, tq, D), q_map),
                pl.BlockSpec((1, tkv, D), kv_map),
                pl.BlockSpec((1, tkv, D), kv_map),
                pl.BlockSpec((tq, half), cq_map),
                pl.BlockSpec((tq, half), cq_map),
                pl.BlockSpec((tkv, half), ck_map),
                pl.BlockSpec((tkv, half), ck_map),
            ],
            out_specs=pl.BlockSpec((1, tq, D), o_map),
            scratch_shapes=[
                pltpu.VMEM((tq, 128), jnp.float32),   # running max m
                pltpu.VMEM((tq, 128), jnp.float32),   # running sum l
                pltpu.VMEM((tq, D), jnp.float32),     # output accumulator
            ]),
        compiler_params=pltpu.CompilerParams(
            dimension_semantics=("parallel", "parallel", "parallel", "arbitrary"),
            vmem_limit_bytes=32 * 1024 * 1024),
    )(xq, xk, xv, cos_q, sin_q, cos_k, sin_k)


# ------------------------------ Module wrapper ----------------------------- #

class AttentionPallas:
    def __init__(self, dim, n_heads, n_kv_heads, key, rope_theta=10000.0):
        self.dim = dim
        self.n_heads = n_heads
        self.n_kv_heads = n_kv_heads
        self.n_rep = n_heads // n_kv_heads
        self.head_dim = dim // n_heads
        self.rope_theta = rope_theta
        D = self.head_dim

        k1, k2, k3, k4 = jax.random.split(key, 4)
        s = 0.02
        # nn.Linear weights: (out_features, in_features), bias=False.
        self.wq = (jax.random.normal(k1, (n_heads * D, dim)) * s).astype(jnp.float32)
        self.wk = (jax.random.normal(k2, (n_kv_heads * D, dim)) * s).astype(jnp.float32)
        self.wv = (jax.random.normal(k3, (n_kv_heads * D, dim)) * s).astype(jnp.float32)
        self.wo = (jax.random.normal(k4, (dim, n_heads * D)) * s).astype(jnp.float32)

        # Init-time weight prep: bake the RoPE column permutation (interleaved
        # (r0,i0,...) -> [r...|i...] per head) into the rows of wq/wk and store
        # all weights pre-transposed, so forward() has no w.T and no gather.
        perm = jnp.concatenate([jnp.arange(0, D, 2, dtype=jnp.int32),
                                jnp.arange(1, D, 2, dtype=jnp.int32)])
        rows_q = (jnp.arange(n_heads, dtype=jnp.int32)[:, None] * D + perm[None, :]).reshape(-1)
        rows_k = (jnp.arange(n_kv_heads, dtype=jnp.int32)[:, None] * D + perm[None, :]).reshape(-1)
        self.wq_t = jnp.asarray(self.wq[rows_q].T)   # (dim, H*D), RoPE-permuted
        self.wk_t = jnp.asarray(self.wk[rows_k].T)   # (dim, KVH*D), RoPE-permuted
        self.wv_t = jnp.asarray(self.wv.T)           # (dim, KVH*D)
        self.wo_t = jnp.asarray(self.wo.T)           # (H*D, dim)

        self._rope_cache = {}

    def _freqs(self, seqlen):
        # Matches Llama precompute_freqs_cis (global_freqs_cis in the module).
        d = self.head_dim
        inv = 1.0 / (self.rope_theta ** (jnp.arange(0, d, 2, dtype=jnp.float32) / d))
        t = jnp.arange(seqlen, dtype=jnp.float32)
        ang = jnp.outer(t, inv)                      # (S, D//2)
        return jnp.cos(ang), jnp.sin(ang)

    def _rope_tables(self, seqlen):
        if seqlen not in self._rope_cache:
            cos, sin = self._freqs(seqlen)
            scale = 1.0 / math.sqrt(self.head_dim)   # fold softmax scale into q side
            self._rope_cache[seqlen] = (cos * scale, sin * scale, cos, sin)
        return self._rope_cache[seqlen]

    def __call__(self, x):
        B, S, dim = x.shape
        H, KVH, D = self.n_heads, self.n_kv_heads, self.head_dim

        x2d = x.reshape(B * S, dim)
        xq = pallas_linear(x2d, self.wq_t).reshape(B, S, H * D)
        xk = pallas_linear(x2d, self.wk_t).reshape(B, S, KVH * D)
        xv = pallas_linear(x2d, self.wv_t).reshape(B, S, KVH * D)

        cos_q, sin_q, cos_k, sin_k = self._rope_tables(S)

        # (B, S, H*D) lane-dense output slab, no head transposes around the call.
        attn = pallas_flash_attention(
            xq, xk, xv, cos_q, sin_q, cos_k, sin_k,
            n_heads=H, n_rep=self.n_rep, head_dim=D)

        out = pallas_linear(attn.reshape(B * S, H * D), self.wo_t)
        return out.reshape(B, S, dim)


# --------------------------- pure-JAX reference ----------------------------- #

def reference(x, mod: AttentionPallas):
    B, S, dim = x.shape
    H, KVH, D, n_rep = mod.n_heads, mod.n_kv_heads, mod.head_dim, mod.n_rep
    xq = (x.reshape(B * S, dim) @ mod.wq.T).reshape(B, S, H, D)
    xk = (x.reshape(B * S, dim) @ mod.wk.T).reshape(B, S, KVH, D)
    xv = (x.reshape(B * S, dim) @ mod.wv.T).reshape(B, S, KVH, D)

    cos, sin = mod._freqs(S)
    cos = cos[None, :, None, :]
    sin = sin[None, :, None, :]

    def rope(t):
        tr = t[..., 0::2]
        ti = t[..., 1::2]
        out_r = tr * cos - ti * sin
        out_i = tr * sin + ti * cos
        return jnp.stack([out_r, out_i], axis=-1).reshape(t.shape)

    xq = rope(xq)
    xk = rope(xk)

    keys = jnp.repeat(xk, n_rep, axis=2)
    values = jnp.repeat(xv, n_rep, axis=2)

    xq = jnp.transpose(xq, (0, 2, 1, 3))
    keys = jnp.transpose(keys, (0, 2, 1, 3))
    values = jnp.transpose(values, (0, 2, 1, 3))

    scores = jnp.einsum("bhqd,bhkd->bhqk", xq, keys) / math.sqrt(D)
    mask = jnp.triu(jnp.full((S, S), -jnp.inf, dtype=jnp.float32), k=1)
    scores = scores + mask[None, None]
    probs = jax.nn.softmax(scores, axis=-1)
    out = jnp.einsum("bhqk,bhkd->bhqd", probs, values)
    out = jnp.transpose(out, (0, 2, 1, 3)).reshape(B * S, H * D)
    return (out @ mod.wo.T).reshape(B, S, dim)


if __name__ == "__main__":
    # Small but tile-aligned ModelArgs: dim=256, n_heads=2, n_kv_heads=1
    # -> head_dim=128, n_rep=2; batch=2, seqlen=256 (2 q-tiles x 2 kv-tiles
    # so causal tile-skipping and online softmax are exercised).
    B, S, dim, n_heads, n_kv_heads = 2, 256, 256, 2, 1

    key = jax.random.PRNGKey(0)
    kx, kw = jax.random.split(key)
    x = jax.random.normal(kx, (B, S, dim), dtype=jnp.float32)

    mod = AttentionPallas(dim, n_heads, n_kv_heads, kw)

    out = jax.block_until_ready(mod(x))

    ref = reference(x, mod)
    assert out.shape == (B, S, dim)
    assert jnp.allclose(out, ref, atol=2e-2, rtol=2e-2), "mismatch vs reference"

    print("KERNEL_OK")
</pallas_src>

<mosaic_0001>
module attributes {stable_mosaic.version = 11 : i64} {
  func.func @_linear_kernel(%arg0: i32, %arg1: i32, %arg2: i32, %arg3: memref<256x256xf32, #tpu.memory_space<vmem>>, %arg4: memref<256x256xf32, #tpu.memory_space<vmem>>, %arg5: memref<256x256xf32, #tpu.memory_space<vmem>>, %arg6: memref<256x256xf32, #tpu.memory_space<vmem>>) attributes {dimension_semantics = [#tpu.dimension_semantics<parallel>, #tpu.dimension_semantics<parallel>, #tpu.dimension_semantics<arbitrary>], iteration_bounds = array<i64: 2, 1, 1>, scalar_prefetch = 0 : i64, scratch_operands = 1 : i64, tpu.core_type = #tpu.core_type<tc>, window_params = [{transform_indices = @transform_0, window_bounds = array<i64: 256, 256>}, {transform_indices = @transform_1, window_bounds = array<i64: 256, 256>}, {transform_indices = @transform_2, window_bounds = array<i64: 256, 256>}]} {
    %c0_i32 = arith.constant 0 : i32
    %0 = arith.cmpi eq, %arg2, %c0_i32 : i32
    %1 = arith.extui %0 : i1 to i32
    %c0_i32_0 = arith.constant 0 : i32
    %2 = arith.cmpi ne, %1, %c0_i32_0 : i32
    scf.if %2 {
      %cst_10 = arith.constant 0.000000e+00 : f32
      %12 = vector.broadcast %cst_10 : f32 to vector<256x256xf32>
      %c0_11 = arith.constant 0 : index
      %c0_12 = arith.constant 0 : index
      %13 = vector.load %arg6[%c0_11, %c0_12] : memref<256x256xf32, #tpu.memory_space<vmem>>, vector<256x256xf32>
      tpu.vector_store %arg6[%c0_11, %c0_12], %12 {strides = array<i32>} : memref<256x256xf32, #tpu.memory_space<vmem>>, vector<256x256xf32>,
    } else {
    }
    %c0 = arith.constant 0 : index
    %c0_1 = arith.constant 0 : index
    %3 = vector.load %arg6[%c0, %c0_1] : memref<256x256xf32, #tpu.memory_space<vmem>>, vector<256x256xf32>
    %c0_2 = arith.constant 0 : index
    %c0_3 = arith.constant 0 : index
    %4 = vector.load %arg3[%c0_2, %c0_3] : memref<256x256xf32, #tpu.memory_space<vmem>>, vector<256x256xf32>
    %c0_4 = arith.constant 0 : index
    %c0_5 = arith.constant 0 : index
    %5 = vector.load %arg4[%c0_4, %c0_5] : memref<256x256xf32, #tpu.memory_space<vmem>>, vector<256x256xf32>
    %cst = arith.constant dense<0.000000e+00> : vector<256x256xf32>
    %6 = tpu.matmul %4, %5, %cst {dimension_numbers = #tpu.dot_dimension_numbers<[1], [0], [0], [1], [0, 0, 1, 1], [], []>} : vector<256x256xf32>, vector<256x256xf32>, vector<256x256xf32> -> vector<256x256xf32>
    %7 = arith.addf %3, %6 : vector<256x256xf32>
    %c0_6 = arith.constant 0 : index
    %c0_7 = arith.constant 0 : index
    %8 = vector.load %arg6[%c0_6, %c0_7] : memref<256x256xf32, #tpu.memory_space<vmem>>, vector<256x256xf32>
    tpu.vector_store %arg6[%c0_6, %c0_7], %7 {strides = array<i32>} : memref<256x256xf32, #tpu.memory_space<vmem>>, vector<256x256xf32>,
    %c0_i32_8 = arith.constant 0 : i32
    %9 = arith.cmpi eq, %arg2, %c0_i32_8 : i32
    %10 = arith.extui %9 : i1 to i32
    %c0_i32_9 = arith.constant 0 : i32
    %11 = arith.cmpi ne, %10, %c0_i32_9 : i32
    scf.if %11 {
      %c0_10 = arith.constant 0 : index
      %c0_11 = arith.constant 0 : index
      %12 = vector.load %arg6[%c0_10, %c0_11] : memref<256x256xf32, #tpu.memory_space<vmem>>, vector<256x256xf32>
      %c0_12 = arith.constant 0 : index
      %c0_13 = arith.constant 0 : index
      %13 = vector.load %arg5[%c0_12, %c0_13] : memref<256x256xf32, #tpu.memory_space<vmem>>, vector<256x256xf32>
      tpu.vector_store %arg5[%c0_12, %c0_13], %12 {strides = array<i32>} : memref<256x256xf32, #tpu.memory_space<vmem>>, vector<256x256xf32>,
    } else {
    }
    return
  }
  func.func @transform_0(%arg0: i32, %arg1: i32, %arg2: i32) -> (i32, i32) {
    %c0_i32 = arith.constant 0 : i32
    return %arg0, %arg2 : i32, i32
  }
  func.func @transform_1(%arg0: i32, %arg1: i32, %arg2: i32) -> (i32, i32) {
    %c0_i32 = arith.constant 0 : i32
    return %arg2, %arg1 : i32, i32
  }
  func.func @transform_2(%arg0: i32, %arg1: i32, %arg2: i32) -> (i32, i32) {
    %c0_i32 = arith.constant 0 : i32
    return %arg0, %arg1 : i32, i32
  }
}

</mosaic_0001>

<llo_original>
// kernel: tpu_custom_call.1
$region0: #{tpu_custom_call.1}
  #allocation0 [shape = 'u32[]', space=smem, size = 0x4, offset = 0x4, fixed_abs, tag = 'smem constant byte address 0x4 - core index']
  #allocation1 [shape = 'u32[144,128]{1,0:T(1,128)}', space=vmem, size = 0x12000, scoped, tag = 'internal scratch']
  #allocation2 [shape = 'f32[256,256]{1,0:T(8,128)}', space=vmem, size = 0x40000, scoped, tag = 'scratch operand']
  %s0 = inlined_call_operand.hbm [shape: f32[512,256], index: 0, kind: input, shape index: {}]
  %s1 = inlined_call_operand.hbm [shape: f32[256,256], index: 1, kind: input, shape index: {}]
  %s2 = inlined_call_operand.hbm [shape: f32[512,256], index: 2, kind: output, shape index: {}]
  %s3 = sld [smem:[#allocation0]]
  $region57: #{tpu_custom_call.1} parent=0
    _
  %s5 = ssub.s32 1, %s3
  %s6 = scalar_select 0, %s5, %s3
  $region1: #{tpu_custom_call.1} parent=0
    #allocation3 [shape = 'u8[524288]{0}', space=vmem, size = 0x80000, scoped, tag = 'input window, operand 0']
    #allocation4 [shape = 's32[2]{0}', space=sflag, size = 0x8, scoped, tag = 'scoped memory for tpu_custom_call.1']
    #allocation5 [shape = 's32[2]{0}', space=sflag, size = 0x8, scoped, tag = 'scoped memory for tpu_custom_call.1']
    #allocation6 [shape = 'u8[262144]{0}', space=vmem, size = 0x40000, scoped, tag = 'input window, operand 1, single buffered']
    #allocation7 [shape = 's32[1]{0}', space=sflag, size = 0x4, scoped, tag = 'scoped memory for tpu_custom_call.1']
    #allocation8 [shape = 'u8[524288]{0}', space=vmem, size = 0x80000, scoped, tag = 'output window, operand 0']
    %7 = vsyncpa [#allocation4], 0
    %s8 = scalar_lea.sflag [#allocation4], 1
    %9 = vsyncpa %s8, 0
    %10 = vsyncpa [#allocation7], 0
    %11 = vsyncpa [#allocation5], 0
    %s12 = scalar_lea.sflag [#allocation5], 1
    %13 = vsyncpa %s12, 0
    loop: start=0, step=1, limit=4
    $region2: #{tpu_custom_call.1} parent=1 // loop_pre_header
      _
    $region3: #{tpu_custom_call.1} parent=1 // loop_header
      %s15 = sphi 0, %s19
      %p16 = scmp.ge.s32.totalorder %s15, 4
      %s22 = sphi 0, %s41
      %s23 = sphi 0, %s37
      %s24 = sphi 0, %s33
      %s25 = sphi 0, %s22
      %s26 = sphi 0, %s23
      %s27 = sphi 0, %s24
      %s28 = sphi 0, %s25
      %s29 = sphi 0, %s26
      %s30 = sphi 0, %s27
      %s46 = sphi 0, %s48
      %s49 = sphi 0, %s46
      %s50 = sphi 0, %s49
      %s66 = sphi 0, %s50
      %s74 = sphi 0, %s76
      %s77 = sphi 0, %s74
      %s78 = sphi 0, %s77
      %s94 = sphi 0, %s78
      %s102 = sphi 0, %s104
      %s105 = sphi 0, %s102
      %s106 = sphi 0, %s105
      %s122 = sphi 0, %s106
    $region4: #{tpu_custom_call.1} parent=1 // loop_header_branch
      %18 = sbr.rel (%p16) target = $region8
    $region5: #{tpu_custom_call.1} parent=1 // loop_body
      %s20 = ssub.s32 %s15, 1
      %s21 = ssub.s32 %s15, 2
      %s31 = sadd.s32 1, %s24
      %p32 = scmp.ge.s32.totalorder %s31, 1
      %s33 = scalar_select %p32, 0, %s31
      %s34 = sadd.s32 1, %s23
      %s35 = scalar_select %p32, %s34, %s23
      %p36 = scmp.ge.s32.totalorder %s35, 1
      %s37 = scalar_select %p36, 0, %s35
      %s38 = sadd.s32 1, %s22
      %s39 = scalar_select %p36, %s38, %s22
      %p40 = scmp.ge.s32.totalorder %s39, 2
      %s41 = scalar_select %p40, 0, %s39
      %s42 = ssub.s32 %s22, %s41
      %s43 = ssub.s32 %s24, %s33
      %s44 = sor.u32 %s42, %s43
      %p45 = scmp.eq.s32.totalorder %s44, 0
      %s47 = sadd.s32 %s46, 1
      %s48 = scalar_select %p45, %s46, %s47
      %p51 = pneg %p45
      %p52 = scmp.eq.s32.totalorder %s15, 1
      %p53 = por %p51, %p52
      %p54 = scmp.ne.s32.totalorder %s46, %s49
      %p55 = scmp.eq.s32.totalorder %s15, 0
      %p56 = por %p54, %p55
      %p57 = scmp.ne.s32.totalorder %s46, %s49
      %p58 = scmp.eq.s32.totalorder %s20, 1
      %p59 = por %p57, %p58
      %p60 = scmp.ne.s32.totalorder %s49, %s50
      %p61 = scmp.eq.s32.totalorder %s20, 0
      %p62 = por %p60, %p61
      %p63 = scmp.ne.s32.totalorder %s49, %s50
      %p64 = scmp.eq.s32.totalorder %s21, 1
      %p65 = por %p63, %p64
      %p67 = scmp.ne.s32.totalorder %s50, %s66
      %p68 = scmp.eq.s32.totalorder %s21, 0
      %p69 = por %p67, %p68
      %s70 = ssub.s32 %s24, %s33
      %s71 = ssub.s32 %s23, %s37
      %s72 = sor.u32 %s70, %s71
      %p73 = scmp.eq.s32.totalorder %s72, 0
      %s75 = sadd.s32 %s74, 1
      %s76 = scalar_select %p73, %s74, %s75
      %p79 = pneg %p73
      %p80 = scmp.eq.s32.totalorder %s15, 1
      %p81 = por %p79, %p80
      %p82 = scmp.ne.s32.totalorder %s74, %s77
      %p83 = scmp.eq.s32.totalorder %s15, 0
      %p84 = por %p82, %p83
      %p85 = scmp.ne.s32.totalorder %s74, %s77
      %p86 = scmp.eq.s32.totalorder %s20, 1
      %p87 = por %p85, %p86
      %p88 = scmp.ne.s32.totalorder %s77, %s78
      %p89 = scmp.eq.s32.totalorder %s20, 0
      %p90 = por %p88, %p89
      %p91 = scmp.ne.s32.totalorder %s77, %s78
      %p92 = scmp.eq.s32.totalorder %s21, 1
      %p93 = por %p91, %p92
      %p95 = scmp.ne.s32.totalorder %s78, %s94
      %p96 = scmp.eq.s32.totalorder %s21, 0
      %p97 = por %p95, %p96
      %s98 = ssub.s32 %s22, %s41
      %s99 = ssub.s32 %s23, %s37
      %s100 = sor.u32 %s98, %s99
      %p101 = scmp.eq.s32.totalorder %s100, 0
      %s103 = sadd.s32 %s102, 1
      %s104 = scalar_select %p101, %s102, %s103
      %p107 = pneg %p101
      %p108 = scmp.eq.s32.totalorder %s15, 1
      %p109 = por %p107, %p108
      %p110 = scmp.ne.s32.totalorder %s102, %s105
      %p111 = scmp.eq.s32.totalorder %s15, 0
      %p112 = por %p110, %p111
      %p113 = scmp.ne.s32.totalorder %s102, %s105
      %p114 = scmp.eq.s32.totalorder %s20, 1
      %p115 = por %p113, %p114
      %p116 = scmp.ne.s32.totalorder %s105, %s106
      %p117 = scmp.eq.s32.totalorder %s20, 0
      %p118 = por %p116, %p117
      %p119 = scmp.ne.s32.totalorder %s105, %s106
      %p120 = scmp.eq.s32.totalorder %s21, 1
      %p121 = por %p119, %p120
      %p123 = scmp.ne.s32.totalorder %s106, %s122
      %p124 = scmp.eq.s32.totalorder %s21, 0
      %p125 = por %p123, %p124
      %p126 = scmp.le.s32.totalorder 1, %s15
      %p127 = scmp.lt.s32.totalorder %s15, 3
      %p128 = pnand %p126, %p127
      %p129 = pneg %p128
      // Predicated region
      $region9: #{tpu_custom_call.1} parent=5 // pred_check
        _
      $region10: #{tpu_custom_call.1} parent=5 // pred_check_branch
        %131 = sbr.rel (%p128) target = $region12
      $region11: #{tpu_custom_call.1} parent=5 // pred_region
        %s132 = ssub.s32 %s15, 1
        // Predicated region
        $region13: #{tpu_custom_call.1} parent=11 // pred_check
          %p133 = pneg %p90
        $region14: #{tpu_custom_call.1} parent=11 // pred_check_branch
          %135 = sbr.rel (%p133) target = $region16
        $region15: #{tpu_custom_call.1} parent=11 // pred_region
          %s136 = smul.u32 32, %s27
          %s137 = smul.u32 2, %s26
          %s139 = ssub.s32 8192, 8192
          %140 = vsyncadd [#allocation7], %s139
          %s141 = smul.addr %s136, 2
          %s142 = sadd.s32 %s137, %s141
          %s143 = smul.addr %s142, 128
          %s144 = scalar_lea.hbm %s1, %s143
          %s145 = sshll.u32 [#allocation6], 4
          %s146 = int_to_ptr.vmem [resolvable:$true] %s145
          %151 = dma.hbm_to_vmem [thread:$0]  %s144, 8192, %s146, [#allocation7], 256, 256, 16
        $region16: #{tpu_custom_call.1} parent=11 // pred_fallthru
          _
      $region12: #{tpu_custom_call.1} parent=5 // pred_fallthru
        _
      %p152 = scmp.lt.s32.totalorder %s15, 2
      // Predicated region
      $region17: #{tpu_custom_call.1} parent=5 // pred_check
        %p153 = pneg %p152
      $region18: #{tpu_custom_call.1} parent=5 // pred_check_branch
        %155 = sbr.rel (%p153) target = $region20
      $region19: #{tpu_custom_call.1} parent=5 // pred_region
        // Predicated region
        $region21: #{tpu_custom_call.1} parent=19 // pred_check
          %p156 = pneg %p56
        $region22: #{tpu_custom_call.1} parent=19 // pred_check_branch
          %158 = sbr.rel (%p156) target = $region24
        $region23: #{tpu_custom_call.1} parent=19 // pred_region
          %s159 = sand.u32 %s46, 1
          %s160 = scalar_lea.sflag [#allocation4], %s159
          %s161 = sand.u32 %s46, 1
          %s162 = smul.addr %s161, 512
          %s163 = scalar_lea.vmem [#allocation3], %s162
          %s164 = smul.u32 32, %s22
          %s165 = smul.u32 2, %s24
          %s167 = ssub.s32 8192, 8192
          %168 = vsyncadd %s160, %s167
          %s169 = smul.addr %s164, 2
          %s170 = sadd.s32 %s165, %s169
          %s171 = smul.addr %s170, 128
          %s172 = scalar_lea.hbm %s0, %s171
          %s173 = sshll.u32 %s163, 4
          %s174 = int_to_ptr.vmem [resolvable:$true] %s173
          %179 = dma.hbm_to_vmem [thread:$0]  %s172, 8192, %s174, %s160, 256, 256, 16
        $region24: #{tpu_custom_call.1} parent=19 // pred_fallthru
          _
      $region20: #{tpu_custom_call.1} parent=5 // pred_fallthru
        _
      %p180 = scmp.le.s32.totalorder 1, %s15
      %p181 = scmp.lt.s32.totalorder %s15, 3
      %p182 = pnand %p180, %p181
      %p183 = pneg %p182
      // Predicated region
      $region25: #{tpu_custom_call.1} parent=5 // pred_check
        _
      $region26: #{tpu_custom_call.1} parent=5 // pred_check_branch
        %185 = sbr.rel (%p182) target = $region28
      $region27: #{tpu_custom_call.1} parent=5 // pred_region
        %s186 = ssub.s32 %s15, 1
        %s187 = sand.u32 %s49, 1
        %s188 = scalar_lea.sflag [#allocation4], %s187
        %s189 = sand.u32 %s49, 1
        %s190 = smul.addr %s189, 512
        %s191 = scalar_lea.vmem [#allocation3], %s190
        // Predicated region
        $region29: #{tpu_custom_call.1} parent=27 // pred_check
          %p192 = pneg %p62
        $region30: #{tpu_custom_call.1} parent=27 // pred_check_branch
          %194 = sbr.rel (%p192) target = $region32
        $region31: #{tpu_custom_call.1} parent=27 // pred_region
          %195 = dma.done %s188, 8192
        $region32: #{tpu_custom_call.1} parent=27 // pred_fallthru
          _
        // Predicated region
        $region33: #{tpu_custom_call.1} parent=27 // pred_check
          %p196 = pneg %p90
        $region34: #{tpu_custom_call.1} parent=27 // pred_check_branch
          %198 = sbr.rel (%p196) target = $region36
        $region35: #{tpu_custom_call.1} parent=27 // pred_region
          %199 = dma.done [#allocation7], 8192
        $region36: #{tpu_custom_call.1} parent=27 // pred_fallthru
          _
        %s200 = sand.u32 %s49, 1
        %s201 = scalar_lea.sflag [#allocation4], %s200
        %s202 = sand.u32 %s49, 1
        %s203 = smul.addr %s202, 512
        %s204 = scalar_lea.vmem [#allocation3], %s203
        %p205 = pneg %p62
        %p206 = pneg %p59
        %p207 = pneg %p90
        %p208 = pneg %p87
        %p209 = pneg %p118
        %p210 = pneg %p115
        %s211 = sand.u32 %s105, 1
        %s212 = scalar_lea.sflag [#allocation5], %s211
        %s213 = sand.u32 %s105, 1
        %s214 = smul.addr %s213, 512
        %s215 = scalar_lea.vmem [#allocation8], %s214
        %s216 = smul.u32 32, %s25
        %s217 = smul.u32 2, %s27
        %s218 = smul.u32 32, %s27
        %s219 = smul.u32 2, %s26
        %s220 = smul.u32 32, %s25
        %s221 = smul.u32 2, %s26
        %p222 = scmp.eq.s32.totalorder %s27, 0
        // Predicated region
        $region37: #{tpu_custom_call.1} parent=27 // pred_check
          %p223 = pneg %p222
        $region38: #{tpu_custom_call.1} parent=27 // pred_check_branch
          %225 = sbr.rel (%p223) target = $region40
        $region39: #{tpu_custom_call.1} parent=27 // pred_region
          %226 = vst [vmem:[#allocation2] sm:$0xff] 0.0
          %227 = vst [vmem:[#allocation2 + $0x8] sm:$0xff] 0.0
          %228 = vst [vmem:[#allocation2 + $0x10] sm:$0xff] 0.0
          %229 = vst [vmem:[#allocation2 + $0x18] sm:$0xff] 0.0
          %230 = vst [vmem:[#allocation2 + $0x20] sm:$0xff] 0.0
          %231 = vst [vmem:[#allocation2 + $0x28] sm:$0xff] 0.0
          %232 = vst [vmem:[#allocation2 + $0x30] sm:$0xff] 0.0
          %233 = vst [vmem:[#allocation2 + $0x38] sm:$0xff] 0.0
          %234 = vst [vmem:[#allocation2 + $0x40] sm:$0xff] 0.0
          %235 = vst [vmem:[#allocation2 + $0x48] sm:$0xff] 0.0
          %236 = vst [vmem:[#allocation2 + $0x50] sm:$0xff] 0.0
          %237 = vst [vmem:[#allocation2 + $0x58] sm:$0xff] 0.0
          %238 = vst [vmem:[#allocation2 + $0x60] sm:$0xff] 0.0
          %239 = vst [vmem:[#allocation2 + $0x68] sm:$0xff] 0.0
          %240 = vst [vmem:[#allocation2 + $0x70] sm:$0xff] 0.0
          %241 = vst [vmem:[#allocation2 + $0x78] sm:$0xff] 0.0
          %242 = vst [vmem:[#allocation2 + $0x80] sm:$0xff] 0.0
          %243 = vst [vmem:[#allocation2 + $0x88] sm:$0xff] 0.0
          %244 = vst [vmem:[#allocation2 + $0x90] sm:$0xff] 0.0
          %245 = vst [vmem:[#allocation2 + $0x98] sm:$0xff] 0.0
          %246 = vst [vmem:[#allocation2 + $0xa0] sm:$0xff] 0.0
          %247 = vst [vmem:[#allocation2 + $0xa8] sm:$0xff] 0.0
          %248 = vst [vmem:[#allocation2 + $0xb0] sm:$0xff] 0.0
          %249 = vst [vmem:[#allocation2 + $0xb8] sm:$0xff] 0.0
          %250 = vst [vmem:[#allocation2 + $0xc0] sm:$0xff] 0.0
          %251 = vst [vmem:[#allocation2 + $0xc8] sm:$0xff] 0.0
          %252 = vst [vmem:[#allocation2 + $0xd0] sm:$0xff] 0.0
          %253 = vst [vmem:[#allocation2 + $0xd8] sm:$0xff] 0.0
          %254 = vst [vmem:[#allocation2 + $0xe0] sm:$0xff] 0.0
          %255 = vst [vmem:[#allocation2 + $0xe8] sm:$0xff] 0.0
          %256 = vst [vmem:[#allocation2 + $0xf0] sm:$0xff] 0.0
          %257 = vst [vmem:[#allocation2 + $0xf8] sm:$0xff] 0.0
          %258 = vst [vmem:[#allocation2 + $0x100] sm:$0xff] 0.0
          %259 = vst [vmem:[#allocation2 + $0x108] sm:$0xff] 0.0
          %260 = vst [vmem:[#allocation2 + $0x110] sm:$0xff] 0.0
          %261 = vst [vmem:[#allocation2 + $0x118] sm:$0xff] 0.0
          %262 = vst [vmem:[#allocation2 + $0x120] sm:$0xff] 0.0
          %263 = vst [vmem:[#allocation2 + $0x128] sm:$0xff] 0.0
          %264 = vst [vmem:[#allocation2 + $0x130] sm:$0xff] 0.0
          %265 = vst [vmem:[#allocation2 + $0x138] sm:$0xff] 0.0
          %266 = vst [vmem:[#allocation2 + $0x140] sm:$0xff] 0.0
          %267 = vst [vmem:[#allocation2 + $0x148] sm:$0xff] 0.0
          %268 = vst [vmem:[#allocation2 + $0x150] sm:$0xff] 0.0
          %269 = vst [vmem:[#allocation2 + $0x158] sm:$0xff] 0.0
          %270 = vst [vmem:[#allocation2 + $0x160] sm:$0xff] 0.0
          %271 = vst [vmem:[#allocation2 + $0x168] sm:$0xff] 0.0
          %272 = vst [vmem:[#allocation2 + $0x170] sm:$0xff] 0.0
          %273 = vst [vmem:[#allocation2 + $0x178] sm:$0xff] 0.0
          %274 = vst [vmem:[#allocation2 + $0x180] sm:$0xff] 0.0
          %275 = vst [vmem:[#allocation2 + $0x188] sm:$0xff] 0.0
          %276 = vst [vmem:[#allocation2 + $0x190] sm:$0xff] 0.0
          %277 = vst [vmem:[#allocation2 + $0x198] sm:$0xff] 0.0
          %278 = vst [vmem:[#allocation2 + $0x1a0] sm:$0xff] 0.0
          %279 = vst [vmem:[#allocation2 + $0x1a8] sm:$0xff] 0.0
          %280 = vst [vmem:[#allocation2 + $0x1b0] sm:$0xff] 0.0
          %281 = vst [vmem:[#allocation2 + $0x1b8] sm:$0xff] 0.0
          %282 = vst [vmem:[#allocation2 + $0x1c0] sm:$0xff] 0.0
          %283 = vst [vmem:[#allocation2 + $0x1c8] sm:$0xff] 0.0
          %284 = vst [vmem:[#allocation2 + $0x1d0] sm:$0xff] 0.0
          %285 = vst [vmem:[#allocation2 + $0x1d8] sm:$0xff] 0.0
          %286 = vst [vmem:[#allocation2 + $0x1e0] sm:$0xff] 0.0
          %287 = vst [vmem:[#allocation2 + $0x1e8] sm:$0xff] 0.0
          %288 = vst [vmem:[#allocation2 + $0x1f0] sm:$0xff] 0.0
          %289 = vst [vmem:[#allocation2 + $0x1f8] sm:$0xff] 0.0
        $region40: #{tpu_custom_call.1} parent=27 // pred_fallthru
          _
        %v290 = vld [vmem:[#allocation2] sm:$0xff]
        %v291 = vld [vmem:[#allocation2 + $0x8] sm:$0xff]
        %v292 = vld [vmem:[#allocation2 + $0x10] sm:$0xff]
        %v293 = vld [vmem:[#allocation2 + $0x18] sm:$0xff]
        %v294 = vld [vmem:[#allocation2 + $0x20] sm:$0xff]
        %v295 = vld [vmem:[#allocation2 + $0x28] sm:$0xff]
        %v296 = vld [vmem:[#allocation2 + $0x30] sm:$0xff]
        %v297 = vld [vmem:[#allocation2 + $0x38] sm:$0xff]
        %v298 = vld [vmem:[#allocation2 + $0x40] sm:$0xff]
        %v299 = vld [vmem:[#allocation2 + $0x48] sm:$0xff]
        %v300 = vld [vmem:[#allocation2 + $0x50] sm:$0xff]
        %v301 = vld [vmem:[#allocation2 + $0x58] sm:$0xff]
        %v302 = vld [vmem:[#allocation2 + $0x60] sm:$0xff]
        %v303 = vld [vmem:[#allocation2 + $0x68] sm:$0xff]
        %v304 = vld [vmem:[#allocation2 + $0x70] sm:$0xff]
        %v305 = vld [vmem:[#allocation2 + $0x78] sm:$0xff]
        %v306 = vld [vmem:[#allocation2 + $0x80] sm:$0xff]
        %v307 = vld [vmem:[#allocation2 + $0x88] sm:$0xff]
        %v308 = vld [vmem:[#allocation2 + $0x90] sm:$0xff]
        %v309 = vld [vmem:[#allocation2 + $0x98] sm:$0xff]
        %v310 = vld [vmem:[#allocation2 + $0xa0] sm:$0xff]
        %v311 = vld [vmem:[#allocation2 + $0xa8] sm:$0xff]
        %v312 = vld [vmem:[#allocation2 + $0xb0] sm:$0xff]
        %v313 = vld [vmem:[#allocation2 + $0xb8] sm:$0xff]
        %v314 = vld [vmem:[#allocation2 + $0xc0] sm:$0xff]
        %v315 = vld [vmem:[#allocation2 + $0xc8] sm:$0xff]
        %v316 = vld [vmem:[#allocation2 + $0xd0] sm:$0xff]
        %v317 = vld [vmem:[#allocation2 + $0xd8] sm:$0xff]
        %v318 = vld [vmem:[#allocation2 + $0xe0] sm:$0xff]
        %v319 = vld [vmem:[#allocation2 + $0xe8] sm:$0xff]
        %v320 = vld [vmem:[#allocation2 + $0xf0] sm:$0xff]
        %v321 = vld [vmem:[#allocation2 + $0xf8] sm:$0xff]
        %v322 = vld [vmem:[#allocation2 + $0x100] sm:$0xff]
        %v323 = vld [vmem:[#allocation2 + $0x108] sm:$0xff]
        %v324 = vld [vmem:[#allocation2 + $0x110] sm:$0xff]
        %v325 = vld [vmem:[#allocation2 + $0x118] sm:$0xff]
        %v326 = vld [vmem:[#allocation2 + $0x120] sm:$0xff]
        %v327 = vld [vmem:[#allocation2 + $0x128] sm:$0xff]
        %v328 = vld [vmem:[#allocation2 + $0x130] sm:$0xff]
        %v329 = vld [vmem:[#allocation2 + $0x138] sm:$0xff]
        %v330 = vld [vmem:[#allocation2 + $0x140] sm:$0xff]
        %v331 = vld [vmem:[#allocation2 + $0x148] sm:$0xff]
        %v332 = vld [vmem:[#allocation2 + $0x150] sm:$0xff]
        %v333 = vld [vmem:[#allocation2 + $0x158] sm:$0xff]
        %v334 = vld [vmem:[#allocation2 + $0x160] sm:$0xff]
        %v335 = vld [vmem:[#allocation2 + $0x168] sm:$0xff]
        %v336 = vld [vmem:[#allocation2 + $0x170] sm:$0xff]
        %v337 = vld [vmem:[#allocation2 + $0x178] sm:$0xff]
        %v338 = vld [vmem:[#allocation2 + $0x180] sm:$0xff]
        %v339 = vld [vmem:[#allocation2 + $0x188] sm:$0xff]
        %v340 = vld [vmem:[#allocation2 + $0x190] sm:$0xff]
        %v341 = vld [vmem:[#allocation2 + $0x198] sm:$0xff]
        %v342 = vld [vmem:[#allocation2 + $0x1a0] sm:$0xff]
        %v343 = vld [vmem:[#allocation2 + $0x1a8] sm:$0xff]
        %v344 = vld [vmem:[#allocation2 + $0x1b0] sm:$0xff]
        %v345 = vld [vmem:[#allocation2 + $0x1b8] sm:$0xff]
        %v346 = vld [vmem:[#allocation2 + $0x1c0] sm:$0xff]
        %v347 = vld [vmem:[#allocation2 + $0x1c8] sm:$0xff]
        %v348 = vld [vmem:[#allocation2 + $0x1d0] sm:$0xff]
        %v349 = vld [vmem:[#allocation2 + $0x1d8] sm:$0xff]
        %v350 = vld [vmem:[#allocation2 + $0x1e0] sm:$0xff]
        %v351 = vld [vmem:[#allocation2 + $0x1e8] sm:$0xff]
        %v352 = vld [vmem:[#allocation2 + $0x1f0] sm:$0xff]
        %v353 = vld [vmem:[#allocation2 + $0x1f8] sm:$0xff]
        %v354 = vld [vmem:[%s191] sm:$0xff]
        %v355 = vld [vmem:[%s191 + $0x8] sm:$0xff]
        %v356 = vld [vmem:[%s191 + $0x10] sm:$0xff]
        %v357 = vld [vmem:[%s191 + $0x18] sm:$0xff]
        %v358 = vld [vmem:[%s191 + $0x20] sm:$0xff]
        %v359 = vld [vmem:[%s191 + $0x28] sm:$0xff]
        %v360 = vld [vmem:[%s191 + $0x30] sm:$0xff]
        %v361 = vld [vmem:[%s191 + $0x38] sm:$0xff]
        %v362 = vld [vmem:[%s191 + $0x40] sm:$0xff]
        %v363 = vld [vmem:[%s191 + $0x48] sm:$0xff]
        %v364 = vld [vmem:[%s191 + $0x50] sm:$0xff]
        %v365 = vld [vmem:[%s191 + $0x58] sm:$0xff]
        %v366 = vld [vmem:[%s191 + $0x60] sm:$0xff]
        %v367 = vld [vmem:[%s191 + $0x68] sm:$0xff]
        %v368 = vld [vmem:[%s191 + $0x70] sm:$0xff]
        %v369 = vld [vmem:[%s191 + $0x78] sm:$0xff]
        %v370 = vld [vmem:[%s191 + $0x80] sm:$0xff]
        %v371 = vld [vmem:[%s191 + $0x88] sm:$0xff]
        %v372 = vld [vmem:[%s191 + $0x90] sm:$0xff]
        %v373 = vld [vmem:[%s191 + $0x98] sm:$0xff]
        %v374 = vld [vmem:[%s191 + $0xa0] sm:$0xff]
        %v375 = vld [vmem:[%s191 + $0xa8] sm:$0xff]
        %v376 = vld [vmem:[%s191 + $0xb0] sm:$0xff]
        %v377 = vld [vmem:[%s191 + $0xb8] sm:$0xff]
        %v378 = vld [vmem:[%s191 + $0xc0] sm:$0xff]
        %v379 = vld [vmem:[%s191 + $0xc8] sm:$0xff]
        %v380 = vld [vmem:[%s191 + $0xd0] sm:$0xff]
        %v381 = vld [vmem:[%s191 + $0xd8] sm:$0xff]
        %v382 = vld [vmem:[%s191 + $0xe0] sm:$0xff]
        %v383 = vld [vmem:[%s191 + $0xe8] sm:$0xff]
        %v384 = vld [vmem:[%s191 + $0xf0] sm:$0xff]
        %v385 = vld [vmem:[%s191 + $0xf8] sm:$0xff]
        %v386 = vld [vmem:[%s191 + $0x100] sm:$0xff]
        %v387 = vld [vmem:[%s191 + $0x108] sm:$0xff]
        %v388 = vld [vmem:[%s191 + $0x110] sm:$0xff]
        %v389 = vld [vmem:[%s191 + $0x118] sm:$0xff]
        %v390 = vld [vmem:[%s191 + $0x120] sm:$0xff]
        %v391 = vld [vmem:[%s191 + $0x128] sm:$0xff]
        %v392 = vld [vmem:[%s191 + $0x130] sm:$0xff]
        %v393 = vld [vmem:[%s191 + $0x138] sm:$0xff]
        %v394 = vld [vmem:[%s191 + $0x140] sm:$0xff]
        %v395 = vld [vmem:[%s191 + $0x148] sm:$0xff]
        %v396 = vld [vmem:[%s191 + $0x150] sm:$0xff]
        %v397 = vld [vmem:[%s191 + $0x158] sm:$0xff]
        %v398 = vld [vmem:[%s191 + $0x160] sm:$0xff]
        %v399 = vld [vmem:[%s191 + $0x168] sm:$0xff]
        %v400 = vld [vmem:[%s191 + $0x170] sm:$0xff]
        %v401 = vld [vmem:[%s191 + $0x178] sm:$0xff]
        %v402 = vld [vmem:[%s191 + $0x180] sm:$0xff]
        %v403 = vld [vmem:[%s191 + $0x188] sm:$0xff]
        %v404 = vld [vmem:[%s191 + $0x190] sm:$0xff]
        %v405 = vld [vmem:[%s191 + $0x198] sm:$0xff]
        %v406 = vld [vmem:[%s191 + $0x1a0] sm:$0xff]
        %v407 = vld [vmem:[%s191 + $0x1a8] sm:$0xff]
        %v408 = vld [vmem:[%s191 + $0x1b0] sm:$0xff]
        %v409 = vld [vmem:[%s191 + $0x1b8] sm:$0xff]
        %v410 = vld [vmem:[%s191 + $0x1c0] sm:$0xff]
        %v411 = vld [vmem:[%s191 + $0x1c8] sm:$0xff]
        %v412 = vld [vmem:[%s191 + $0x1d0] sm:$0xff]
        %v413 = vld [vmem:[%s191 + $0x1d8] sm:$0xff]
        %v414 = vld [vmem:[%s191 + $0x1e0] sm:$0xff]
        %v415 = vld [vmem:[%s191 + $0x1e8] sm:$0xff]
        %v416 = vld [vmem:[%s191 + $0x1f0] sm:$0xff]
        %v417 = vld [vmem:[%s191 + $0x1f8] sm:$0xff]
        %v418 = vld [vmem:[#allocation6] sm:$0xff]
        %v419 = vld [vmem:[#allocation6 + $0x8] sm:$0xff]
        %v420 = vld [vmem:[#allocation6 + $0x10] sm:$0xff]
        %v421 = vld [vmem:[#allocation6 + $0x18] sm:$0xff]
        %v422 = vld [vmem:[#allocation6 + $0x20] sm:$0xff]
        %v423 = vld [vmem:[#allocation6 + $0x28] sm:$0xff]
        %v424 = vld [vmem:[#allocation6 + $0x30] sm:$0xff]
        %v425 = vld [vmem:[#allocation6 + $0x38] sm:$0xff]
        %v426 = vld [vmem:[#allocation6 + $0x40] sm:$0xff]
        %v427 = vld [vmem:[#allocation6 + $0x48] sm:$0xff]
        %v428 = vld [vmem:[#allocation6 + $0x50] sm:$0xff]
        %v429 = vld [vmem:[#allocation6 + $0x58] sm:$0xff]
        %v430 = vld [vmem:[#allocation6 + $0x60] sm:$0xff]
        %v431 = vld [vmem:[#allocation6 + $0x68] sm:$0xff]
        %v432 = vld [vmem:[#allocation6 + $0x70] sm:$0xff]
        %v433 = vld [vmem:[#allocation6 + $0x78] sm:$0xff]
        %v434 = vld [vmem:[#allocation6 + $0x80] sm:$0xff]
        %v435 = vld [vmem:[#allocation6 + $0x88] sm:$0xff]
        %v436 = vld [vmem:[#allocation6 + $0x90] sm:$0xff]
        %v437 = vld [vmem:[#allocation6 + $0x98] sm:$0xff]
        %v438 = vld [vmem:[#allocation6 + $0xa0] sm:$0xff]
        %v439 = vld [vmem:[#allocation6 + $0xa8] sm:$0xff]
        %v440 = vld [vmem:[#allocation6 + $0xb0] sm:$0xff]
        %v441 = vld [vmem:[#allocation6 + $0xb8] sm:$0xff]
        %v442 = vld [vmem:[#allocation6 + $0xc0] sm:$0xff]
        %v443 = vld [vmem:[#allocation6 + $0xc8] sm:$0xff]
        %v444 = vld [vmem:[#allocation6 + $0xd0] sm:$0xff]
        %v445 = vld [vmem:[#allocation6 + $0xd8] sm:$0xff]
        %v446 = vld [vmem:[#allocation6 + $0xe0] sm:$0xff]
        %v447 = vld [vmem:[#allocation6 + $0xe8] sm:$0xff]
        %v448 = vld [vmem:[#allocation6 + $0xf0] sm:$0xff]
        %v449 = vld [vmem:[#allocation6 + $0xf8] sm:$0xff]
        %v450 = vld [vmem:[#allocation6 + $0x100] sm:$0xff]
        %v451 = vld [vmem:[#allocation6 + $0x108] sm:$0xff]
        %v452 = vld [vmem:[#allocation6 + $0x110] sm:$0xff]
        %v453 = vld [vmem:[#allocation6 + $0x118] sm:$0xff]
        %v454 = vld [vmem:[#allocation6 + $0x120] sm:$0xff]
        %v455 = vld [vmem:[#allocation6 + $0x128] sm:$0xff]
        %v456 = vld [vmem:[#allocation6 + $0x130] sm:$0xff]
        %v457 = vld [vmem:[#allocation6 + $0x138] sm:$0xff]
        %v458 = vld [vmem:[#allocation6 + $0x140] sm:$0xff]
        %v459 = vld [vmem:[#allocation6 + $0x148] sm:$0xff]
        %v460 = vld [vmem:[#allocation6 + $0x150] sm:$0xff]
        %v461 = vld [vmem:[#allocation6 + $0x158] sm:$0xff]
        %v462 = vld [vmem:[#allocation6 + $0x160] sm:$0xff]
        %v463 = vld [vmem:[#allocation6 + $0x168] sm:$0xff]
        %v464 = vld [vmem:[#allocation6 + $0x170] sm:$0xff]
        %v465 = vld [vmem:[#allocation6 + $0x178] sm:$0xff]
        %v466 = vld [vmem:[#allocation6 + $0x180] sm:$0xff]
        %v467 = vld [vmem:[#allocation6 + $0x188] sm:$0xff]
        %v468 = vld [vmem:[#allocation6 + $0x190] sm:$0xff]
        %v469 = vld [vmem:[#allocation6 + $0x198] sm:$0xff]
        %v470 = vld [vmem:[#allocation6 + $0x1a0] sm:$0xff]
        %v471 = vld [vmem:[#allocation6 + $0x1a8] sm:$0xff]
        %v472 = vld [vmem:[#allocation6 + $0x1b0] sm:$0xff]
        %v473 = vld [vmem:[#allocation6 + $0x1b8] sm:$0xff]
        %v474 = vld [vmem:[#allocation6 + $0x1c0] sm:$0xff]
        %v475 = vld [vmem:[#allocation6 + $0x1c8] sm:$0xff]
        %v476 = vld [vmem:[#allocation6 + $0x1d0] sm:$0xff]
        %v477 = vld [vmem:[#allocation6 + $0x1d8] sm:$0xff]
        %v478 = vld [vmem:[#allocation6 + $0x1e0] sm:$0xff]
        %v479 = vld [vmem:[#allocation6 + $0x1e8] sm:$0xff]
        %v480 = vld [vmem:[#allocation6 + $0x1f0] sm:$0xff]
        %v481 = vld [vmem:[#allocation6 + $0x1f8] sm:$0xff]
        %482 = vmatprep.subr.mxu0 %v419
        %483 = vmatpush1.msra.mxu0 %v418
        %484 = vmatprep.subr.mxu0 %v421
        %485 = vmatpush1.msra.mxu0 %v420
        %486 = vmatprep.subr.mxu0 %v423
        %487 = vmatpush1.msra.mxu0 %v422
        %488 = vmatprep.subr.mxu0 %v425
        %489 = vmatpush1.msra.mxu0 %v424
        %490 = vmatprep.subr.mxu0 %v427
        %491 = vmatpush1.msra.mxu0 %v426
        %492 = vmatprep.subr.mxu0 %v429
        %493 = vmatpush1.msra.mxu0 %v428
        %494 = vmatprep.subr.mxu0 %v431
        %495 = vmatpush1.msra.mxu0 %v430
        %496 = vmatprep.subr.mxu0 %v433
        %497 = vmatpush1.msra.mxu0 %v432
        %498 = vmatprep.subr.mxu0 %v435
        %499 = vmatpush1.msra.mxu0 %v434
        %500 = vmatprep.subr.mxu0 %v437
        %501 = vmatpush1.msra.mxu0 %v436
        %502 = vmatprep.subr.mxu0 %v439
        %503 = vmatpush1.msra.mxu0 %v438
        %504 = vmatprep.subr.mxu0 %v441
        %505 = vmatpush1.msra.mxu0 %v440
        %506 = vmatprep.subr.mxu0 %v443
        %507 = vmatpush1.msra.mxu0 %v442
        %508 = vmatprep.subr.mxu0 %v445
        %509 = vmatpush1.msra.mxu0 %v444
        %510 = vmatprep.subr.mxu0 %v447
        %511 = vmatpush1.msra.mxu0 %v446
        %512 = vmatprep.subr.mxu0 %v449
        %513 = vmatpush1.msra.mxu0 %v448
        %514 = vmatprep.subr.mxu0 %v451
        %515 = vmatpush1.msra.mxu0 %v450
        %516 = vmatprep.subr.mxu0 %v453
        %517 = vmatpush1.msra.mxu0 %v452
        %518 = vmatprep.subr.mxu0 %v455
        %519 = vmatpush1.msra.mxu0 %v454
        %520 = vmatprep.subr.mxu0 %v457
        %521 = vmatpush1.msra.mxu0 %v456
        %522 = vmatprep.subr.mxu0 %v459
        %523 = vmatpush1.msra.mxu0 %v458
        %524 = vmatprep.subr.mxu0 %v461
        %525 = vmatpush1.msra.mxu0 %v460
        %526 = vmatprep.subr.mxu0 %v463
        %527 = vmatpush1.msra.mxu0 %v462
        %528 = vmatprep.subr.mxu0 %v465
        %529 = vmatpush1.msra.mxu0 %v464
        %530 = vmatprep.subr.mxu0 %v467
        %531 = vmatpush1.msra.mxu0 %v466
        %532 = vmatprep.subr.mxu0 %v469
        %533 = vmatpush1.msra.mxu0 %v468
        %534 = vmatprep.subr.mxu0 %v471
        %535 = vmatpush1.msra.mxu0 %v470
        %536 = vmatprep.subr.mxu0 %v473
        %537 = vmatpush1.msra.mxu0 %v472
        %538 = vmatprep.subr.mxu0 %v475
        %539 = vmatpush1.msra.mxu0 %v474
        %540 = vmatprep.subr.mxu0 %v477
        %541 = vmatpush1.msra.mxu0 %v476
        %542 = vmatprep.subr.mxu0 %v479
        %543 = vmatpush1.msra.mxu0 %v478
        %544 = vmatprep.subr.mxu0 %v481
        %545 = vmatpush1.msra.mxu0 %v480
        %546 = vmatprep.mubr.f32.mxu0 %v355
        %547 = vmatmul.mubr.f32.gmra.mrb[0].mxu0 %v354
        %v548 = vpop.f32.mrb[0].mxu0
        %v549 = vadd.f32 0.0, %v548
        %v550 = vpop.f32.mrb[0].mxu0
        %v551 = vadd.f32 0.0, %v550
        %552 = vmatprep.mubr.f32.mxu0 %v357
        %553 = vmatmul.mubr.f32.gmra.mrb[0].mxu0 %v356
        %v554 = vpop.f32.mrb[0].mxu0
        %v555 = vadd.f32 0.0, %v554
        %v556 = vpop.f32.mrb[0].mxu0
        %v557 = vadd.f32 0.0, %v556
        %558 = vmatprep.mubr.f32.mxu0 %v359
        %559 = vmatmul.mubr.f32.gmra.mrb[0].mxu0 %v358
        %v560 = vpop.f32.mrb[0].mxu0
        %v561 = vadd.f32 0.0, %v560
        %v562 = vpop.f32.mrb[0].mxu0
        %v563 = vadd.f32 0.0, %v562
        %564 = vmatprep.mubr.f32.mxu0 %v361
        %565 = vmatmul.mubr.f32.gmra.mrb[0].mxu0 %v360
        %v566 = vpop.f32.mrb[0].mxu0
        %v567 = vadd.f32 0.0, %v566
        %v568 = vpop.f32.mrb[0].mxu0
        %v569 = vadd.f32 0.0, %v568
        %570 = vmatprep.mubr.f32.mxu0 %v363
        %571 = vmatmul.mubr.f32.gmra.mrb[0].mxu0 %v362
        %v572 = vpop.f32.mrb[0].mxu0
        %v573 = vadd.f32 0.0, %v572
        %v574 = vpop.f32.mrb[0].mxu0
        %v575 = vadd.f32 0.0, %v574
        %576 = vmatprep.mubr.f32.mxu0 %v365
        %577 = vmatmul.mubr.f32.gmra.mrb[0].mxu0 %v364
        %v578 = vpop.f32.mrb[0].mxu0
        %v579 = vadd.f32 0.0, %v578
        %v580 = vpop.f32.mrb[0].mxu0
        %v581 = vadd.f32 0.0, %v580
        %582 = vmatprep.mubr.f32.mxu0 %v367
        %583 = vmatmul.mubr.f32.gmra.mrb[0].mxu0 %v366
        %v584 = vpop.f32.mrb[0].mxu0
        %v585 = vadd.f32 0.0, %v584
        %v586 = vpop.f32.mrb[0].mxu0
        %v587 = vadd.f32 0.0, %v586
        %588 = vmatprep.mubr.f32.mxu0 %v369
        %589 = vmatmul.mubr.f32.gmra.mrb[0].mxu0 %v368
        %v590 = vpop.f32.mrb[0].mxu0
        %v591 = vadd.f32 0.0, %v590
        %v592 = vpop.f32.mrb[0].mxu0
        %v593 = vadd.f32 0.0, %v592
        %594 = vmatprep.mubr.f32.mxu0 %v371
        %595 = vmatmul.mubr.f32.gmra.mrb[0].mxu0 %v370
        %v596 = vpop.f32.mrb[0].mxu0
        %v597 = vadd.f32 0.0, %v596
        %v598 = vpop.f32.mrb[0].mxu0
        %v599 = vadd.f32 0.0, %v598
        %600 = vmatprep.mubr.f32.mxu0 %v373
        %601 = vmatmul.mubr.f32.gmra.mrb[0].mxu0 %v372
        %v602 = vpop.f32.mrb[0].mxu0
        %v603 = vadd.f32 0.0, %v602
        %v604 = vpop.f32.mrb[0].mxu0
        %v605 = vadd.f32 0.0, %v604
        %606 = vmatprep.mubr.f32.mxu0 %v375
        %607 = vmatmul.mubr.f32.gmra.mrb[0].mxu0 %v374
        %v608 = vpop.f32.mrb[0].mxu0
        %v609 = vadd.f32 0.0, %v608
        %v610 = vpop.f32.mrb[0].mxu0
        %v611 = vadd.f32 0.0, %v610
        %612 = vmatprep.mubr.f32.mxu0 %v377
        %613 = vmatmul.mubr.f32.gmra.mrb[0].mxu0 %v376
        %v614 = vpop.f32.mrb[0].mxu0
        %v615 = vadd.f32 0.0, %v614
        %v616 = vpop.f32.mrb[0].mxu0
        %v617 = vadd.f32 0.0, %v616
        %618 = vmatprep.mubr.f32.mxu0 %v379
        %619 = vmatmul.mubr.f32.gmra.mrb[0].mxu0 %v378
        %v620 = vpop.f32.mrb[0].mxu0
        %v621 = vadd.f32 0.0, %v620
        %v622 = vpop.f32.mrb[0].mxu0
        %v623 = vadd.f32 0.0, %v622
        %624 = vmatprep.mubr.f32.mxu0 %v381
        %625 = vmatmul.mubr.f32.gmra.mrb[0].mxu0 %v380
        %v626 = vpop.f32.mrb[0].mxu0
        %v627 = vadd.f32 0.0, %v626
        %v628 = vpop.f32.mrb[0].mxu0
        %v629 = vadd.f32 0.0, %v628
        %630 = vmatprep.mubr.f32.mxu0 %v383
        %631 = vmatmul.mubr.f32.gmra.mrb[0].mxu0 %v382
        %v632 = vpop.f32.mrb[0].mxu0
        %v633 = vadd.f32 0.0, %v632
        %v634 = vpop.f32.mrb[0].mxu0
        %v635 = vadd.f32 0.0, %v634
        %636 = vmatprep.mubr.f32.mxu0 %v385
        %637 = vmatmul.mubr.f32.gmra.mrb[0].mxu0 %v384
        %v638 = vpop.f32.mrb[0].mxu0
        %v639 = vadd.f32 0.0, %v638
        %v640 = vpop.f32.mrb[0].mxu0
        %v641 = vadd.f32 0.0, %v640
        %642 = vmatprep.mubr.f32.mxu0 %v387
        %643 = vmatmul.mubr.f32.gmra.mrb[0].mxu0 %v386
        %v644 = vpop.f32.mrb[0].mxu0
        %v645 = vadd.f32 0.0, %v644
        %v646 = vpop.f32.mrb[0].mxu0
        %v647 = vadd.f32 0.0, %v646
        %648 = vmatprep.mubr.f32.mxu0 %v389
        %649 = vmatmul.mubr.f32.gmra.mrb[0].mxu0 %v388
        %v650 = vpop.f32.mrb[0].mxu0
        %v651 = vadd.f32 0.0, %v650
        %v652 = vpop.f32.mrb[0].mxu0
        %v653 = vadd.f32 0.0, %v652
        %654 = vmatprep.mubr.f32.mxu0 %v391
        %655 = vmatmul.mubr.f32.gmra.mrb[0].mxu0 %v390
        %v656 = vpop.f32.mrb[0].mxu0
        %v657 = vadd.f32 0.0, %v656
        %v658 = vpop.f32.mrb[0].mxu0
        %v659 = vadd.f32 0.0, %v658
        %660 = vmatprep.mubr.f32.mxu0 %v393
        %661 = vmatmul.mubr.f32.gmra.mrb[0].mxu0 %v392
        %v662 = vpop.f32.mrb[0].mxu0
        %v663 = vadd.f32 0.0, %v662
        %v664 = vpop.f32.mrb[0].mxu0
        %v665 = vadd.f32 0.0, %v664
        %666 = vmatprep.mubr.f32.mxu0 %v395
        %667 = vmatmul.mubr.f32.gmra.mrb[0].mxu0 %v394
        %v668 = vpop.f32.mrb[0].mxu0
        %v669 = vadd.f32 0.0, %v668
        %v670 = vpop.f32.mrb[0].mxu0
        %v671 = vadd.f32 0.0, %v670
        %672 = vmatprep.mubr.f32.mxu0 %v397
        %673 = vmatmul.mubr.f32.gmra.mrb[0].mxu0 %v396
        %v674 = vpop.f32.mrb[0].mxu0
        %v675 = vadd.f32 0.0, %v674
        %v676 = vpop.f32.mrb[0].mxu0
        %v677 = vadd.f32 0.0, %v676
        %678 = vmatprep.mubr.f32.mxu0 %v399
        %679 = vmatmul.mubr.f32.gmra.mrb[0].mxu0 %v398
        %v680 = vpop.f32.mrb[0].mxu0
        %v681 = vadd.f32 0.0, %v680
        %v682 = vpop.f32.mrb[0].mxu0
        %v683 = vadd.f32 0.0, %v682
        %684 = vmatprep.mubr.f32.mxu0 %v401
        %685 = vmatmul.mubr.f32.gmra.mrb[0].mxu0 %v400
        %v686 = vpop.f32.mrb[0].mxu0
        %v687 = vadd.f32 0.0, %v686
        %v688 = vpop.f32.mrb[0].mxu0
        %v689 = vadd.f32 0.0, %v688
        %690 = vmatprep.mubr.f32.mxu0 %v403
        %691 = vmatmul.mubr.f32.gmra.mrb[0].mxu0 %v402
        %v692 = vpop.f32.mrb[0].mxu0
        %v693 = vadd.f32 0.0, %v692
        %v694 = vpop.f32.mrb[0].mxu0
        %v695 = vadd.f32 0.0, %v694
        %696 = vmatprep.mubr.f32.mxu0 %v405
        %697 = vmatmul.mubr.f32.gmra.mrb[0].mxu0 %v404
        %v698 = vpop.f32.mrb[0].mxu0
        %v699 = vadd.f32 0.0, %v698
        %v700 = vpop.f32.mrb[0].mxu0
        %v701 = vadd.f32 0.0, %v700
        %702 = vmatprep.mubr.f32.mxu0 %v407
        %703 = vmatmul.mubr.f32.gmra.mrb[0].mxu0 %v406
        %v704 = vpop.f32.mrb[0].mxu0
        %v705 = vadd.f32 0.0, %v704
        %v706 = vpop.f32.mrb[0].mxu0
        %v707 = vadd.f32 0.0, %v706
        %708 = vmatprep.mubr.f32.mxu0 %v409
        %709 = vmatmul.mubr.f32.gmra.mrb[0].mxu0 %v408
        %v710 = vpop.f32.mrb[0].mxu0
        %v711 = vadd.f32 0.0, %v710
        %v712 = vpop.f32.mrb[0].mxu0
        %v713 = vadd.f32 0.0, %v712
        %714 = vmatprep.mubr.f32.mxu0 %v411
        %715 = vmatmul.mubr.f32.gmra.mrb[0].mxu0 %v410
        %v716 = vpop.f32.mrb[0].mxu0
        %v717 = vadd.f32 0.0, %v716
        %v718 = vpop.f32.mrb[0].mxu0
        %v719 = vadd.f32 0.0, %v718
        %720 = vmatprep.mubr.f32.mxu0 %v413
        %721 = vmatmul.mubr.f32.gmra.mrb[0].mxu0 %v412
        %v722 = vpop.f32.mrb[0].mxu0
        %v723 = vadd.f32 0.0, %v722
        %v724 = vpop.f32.mrb[0].mxu0
        %v725 = vadd.f32 0.0, %v724
        %726 = vmatprep.mubr.f32.mxu0 %v415
        %727 = vmatmul.mubr.f32.gmra.mrb[0].mxu0 %v414
        %v728 = vpop.f32.mrb[0].mxu0
        %v729 = vadd.f32 0.0, %v728
        %v730 = vpop.f32.mrb[0].mxu0
        %v731 = vadd.f32 0.0, %v730
        %732 = vmatprep.mubr.f32.mxu0 %v417
        %733 = vmatmul.mubr.f32.gmra.mrb[0].mxu0 %v416
        %v734 = vpop.f32.mrb[0].mxu0
        %v735 = vadd.f32 0.0, %v734
        %v736 = vpop.f32.mrb[0].mxu0
        %v737 = vadd.f32 0.0, %v736
        %738 = vdwg.mxu0
        %v739 = vadd.f32 %v290, %v549
        %v740 = vadd.f32 %v291, %v551
        %v741 = vadd.f32 %v292, %v555
        %v742 = vadd.f32 %v293, %v557
        %v743 = vadd.f32 %v294, %v561
        %v744 = vadd.f32 %v295, %v563
        %v745 = vadd.f32 %v296, %v567
        %v746 = vadd.f32 %v297, %v569
        %v747 = vadd.f32 %v298, %v573
        %v748 = vadd.f32 %v299, %v575
        %v749 = vadd.f32 %v300, %v579
        %v750 = vadd.f32 %v301, %v581
        %v751 = vadd.f32 %v302, %v585
        %v752 = vadd.f32 %v303, %v587
        %v753 = vadd.f32 %v304, %v591
        %v754 = vadd.f32 %v305, %v593
        %v755 = vadd.f32 %v306, %v597
        %v756 = vadd.f32 %v307, %v599
        %v757 = vadd.f32 %v308, %v603
        %v758 = vadd.f32 %v309, %v605
        %v759 = vadd.f32 %v310, %v609
        %v760 = vadd.f32 %v311, %v611
        %v761 = vadd.f32 %v312, %v615
        %v762 = vadd.f32 %v313, %v617
        %v763 = vadd.f32 %v314, %v621
        %v764 = vadd.f32 %v315, %v623
        %v765 = vadd.f32 %v316, %v627
        %v766 = vadd.f32 %v317, %v629
        %v767 = vadd.f32 %v318, %v633
        %v768 = vadd.f32 %v319, %v635
        %v769 = vadd.f32 %v320, %v639
        %v770 = vadd.f32 %v321, %v641
        %v771 = vadd.f32 %v322, %v645
        %v772 = vadd.f32 %v323, %v647
        %v773 = vadd.f32 %v324, %v651
        %v774 = vadd.f32 %v325, %v653
        %v775 = vadd.f32 %v326, %v657
        %v776 = vadd.f32 %v327, %v659
        %v777 = vadd.f32 %v328, %v663
        %v778 = vadd.f32 %v329, %v665
        %v779 = vadd.f32 %v330, %v669
        %v780 = vadd.f32 %v331, %v671
        %v781 = vadd.f32 %v332, %v675
        %v782 = vadd.f32 %v333, %v677
        %v783 = vadd.f32 %v334, %v681
        %v784 = vadd.f32 %v335, %v683
        %v785 = vadd.f32 %v336, %v687
        %v786 = vadd.f32 %v337, %v689
        %v787 = vadd.f32 %v338, %v693
        %v788 = vadd.f32 %v339, %v695
        %v789 = vadd.f32 %v340, %v699
        %v790 = vadd.f32 %v341, %v701
        %v791 = vadd.f32 %v342, %v705
        %v792 = vadd.f32 %v343, %v707
        %v793 = vadd.f32 %v344, %v711
        %v794 = vadd.f32 %v345, %v713
        %v795 = vadd.f32 %v346, %v717
        %v796 = vadd.f32 %v347, %v719
        %v797 = vadd.f32 %v348, %v723
        %v798 = vadd.f32 %v349, %v725
        %v799 = vadd.f32 %v350, %v729
        %v800 = vadd.f32 %v351, %v731
        %v801 = vadd.f32 %v352, %v735
        %v802 = vadd.f32 %v353, %v737
        %803 = vst [vmem:[#allocation2] sm:$0xff] %v739
        %804 = vst [vmem:[#allocation2 + $0x8] sm:$0xff] %v740
        %805 = vst [vmem:[#allocation2 + $0x10] sm:$0xff] %v741
        %806 = vst [vmem:[#allocation2 + $0x18] sm:$0xff] %v742
        %807 = vst [vmem:[#allocation2 + $0x20] sm:$0xff] %v743
        %808 = vst [vmem:[#allocation2 + $0x28] sm:$0xff] %v744
        %809 = vst [vmem:[#allocation2 + $0x30] sm:$0xff] %v745
        %810 = vst [vmem:[#allocation2 + $0x38] sm:$0xff] %v746
        %811 = vst [vmem:[#allocation2 + $0x40] sm:$0xff] %v747
        %812 = vst [vmem:[#allocation2 + $0x48] sm:$0xff] %v748
        %813 = vst [vmem:[#allocation2 + $0x50] sm:$0xff] %v749
        %814 = vst [vmem:[#allocation2 + $0x58] sm:$0xff] %v750
        %815 = vst [vmem:[#allocation2 + $0x60] sm:$0xff] %v751
        %816 = vst [vmem:[#allocation2 + $0x68] sm:$0xff] %v752
        %817 = vst [vmem:[#allocation2 + $0x70] sm:$0xff] %v753
        %818 = vst [vmem:[#allocation2 + $0x78] sm:$0xff] %v754
        %819 = vst [vmem:[#allocation2 + $0x80] sm:$0xff] %v755
        %820 = vst [vmem:[#allocation2 + $0x88] sm:$0xff] %v756
        %821 = vst [vmem:[#allocation2 + $0x90] sm:$0xff] %v757
        %822 = vst [vmem:[#allocation2 + $0x98] sm:$0xff] %v758
        %823 = vst [vmem:[#allocation2 + $0xa0] sm:$0xff] %v759
        %824 = vst [vmem:[#allocation2 + $0xa8] sm:$0xff] %v760
        %825 = vst [vmem:[#allocation2 + $0xb0] sm:$0xff] %v761
        %826 = vst [vmem:[#allocation2 + $0xb8] sm:$0xff] %v762
        %827 = vst [vmem:[#allocation2 + $0xc0] sm:$0xff] %v763
        %828 = vst [vmem:[#allocation2 + $0xc8] sm:$0xff] %v764
        %829 = vst [vmem:[#allocation2 + $0xd0] sm:$0xff] %v765
        %830 = vst [vmem:[#allocation2 + $0xd8] sm:$0xff] %v766
        %831 = vst [vmem:[#allocation2 + $0xe0] sm:$0xff] %v767
        %832 = vst [vmem:[#allocation2 + $0xe8] sm:$0xff] %v768
        %833 = vst [vmem:[#allocation2 + $0xf0] sm:$0xff] %v769
        %834 = vst [vmem:[#allocation2 + $0xf8] sm:$0xff] %v770
        %835 = vst [vmem:[#allocation2 + $0x100] sm:$0xff] %v771
        %836 = vst [vmem:[#allocation2 + $0x108] sm:$0xff] %v772
        %837 = vst [vmem:[#allocation2 + $0x110] sm:$0xff] %v773
        %838 = vst [vmem:[#allocation2 + $0x118] sm:$0xff] %v774
        %839 = vst [vmem:[#allocation2 + $0x120] sm:$0xff] %v775
        %840 = vst [vmem:[#allocation2 + $0x128] sm:$0xff] %v776
        %841 = vst [vmem:[#allocation2 + $0x130] sm:$0xff] %v777
        %842 = vst [vmem:[#allocation2 + $0x138] sm:$0xff] %v778
        %843 = vst [vmem:[#allocation2 + $0x140] sm:$0xff] %v779
        %844 = vst [vmem:[#allocation2 + $0x148] sm:$0xff] %v780
        %845 = vst [vmem:[#allocation2 + $0x150] sm:$0xff] %v781
        %846 = vst [vmem:[#allocation2 + $0x158] sm:$0xff] %v782
        %847 = vst [vmem:[#allocation2 + $0x160] sm:$0xff] %v783
        %848 = vst [vmem:[#allocation2 + $0x168] sm:$0xff] %v784
        %849 = vst [vmem:[#allocation2 + $0x170] sm:$0xff] %v785
        %850 = vst [vmem:[#allocation2 + $0x178] sm:$0xff] %v786
        %851 = vst [vmem:[#allocation2 + $0x180] sm:$0xff] %v787
        %852 = vst [vmem:[#allocation2 + $0x188] sm:$0xff] %v788
        %853 = vst [vmem:[#allocation2 + $0x190] sm:$0xff] %v789
        %854 = vst [vmem:[#allocation2 + $0x198] sm:$0xff] %v790
        %855 = vst [vmem:[#allocation2 + $0x1a0] sm:$0xff] %v791
        %856 = vst [vmem:[#allocation2 + $0x1a8] sm:$0xff] %v792
        %857 = vst [vmem:[#allocation2 + $0x1b0] sm:$0xff] %v793
        %858 = vst [vmem:[#allocation2 + $0x1b8] sm:$0xff] %v794
        %859 = vst [vmem:[#allocation2 + $0x1c0] sm:$0xff] %v795
        %860 = vst [vmem:[#allocation2 + $0x1c8] sm:$0xff] %v796
        %861 = vst [vmem:[#allocation2 + $0x1d0] sm:$0xff] %v797
        %862 = vst [vmem:[#allocation2 + $0x1d8] sm:$0xff] %v798
        %863 = vst [vmem:[#allocation2 + $0x1e0] sm:$0xff] %v799
        %864 = vst [vmem:[#allocation2 + $0x1e8] sm:$0xff] %v800
        %865 = vst [vmem:[#allocation2 + $0x1f0] sm:$0xff] %v801
        %866 = vst [vmem:[#allocation2 + $0x1f8] sm:$0xff] %v802
        // Predicated region
        $region41: #{tpu_custom_call.1} parent=27 // pred_check
          %p867 = pneg %p222
        $region42: #{tpu_custom_call.1} parent=27 // pred_check_branch
          %869 = sbr.rel (%p867) target = $region44
        $region43: #{tpu_custom_call.1} parent=27 // pred_region
          %v870 = vld [vmem:[#allocation2] sm:$0xff]
          %v871 = vld [vmem:[#allocation2 + $0x8] sm:$0xff]
          %v872 = vld [vmem:[#allocation2 + $0x10] sm:$0xff]
          %v873 = vld [vmem:[#allocation2 + $0x18] sm:$0xff]
          %v874 = vld [vmem:[#allocation2 + $0x20] sm:$0xff]
          %v875 = vld [vmem:[#allocation2 + $0x28] sm:$0xff]
          %v876 = vld [vmem:[#allocation2 + $0x30] sm:$0xff]
          %v877 = vld [vmem:[#allocation2 + $0x38] sm:$0xff]
          %v878 = vld [vmem:[#allocation2 + $0x40] sm:$0xff]
          %v879 = vld [vmem:[#allocation2 + $0x48] sm:$0xff]
          %v880 = vld [vmem:[#allocation2 + $0x50] sm:$0xff]
          %v881 = vld [vmem:[#allocation2 + $0x58] sm:$0xff]
          %v882 = vld [vmem:[#allocation2 + $0x60] sm:$0xff]
          %v883 = vld [vmem:[#allocation2 + $0x68] sm:$0xff]
          %v884 = vld [vmem:[#allocation2 + $0x70] sm:$0xff]
          %v885 = vld [vmem:[#allocation2 + $0x78] sm:$0xff]
          %v886 = vld [vmem:[#allocation2 + $0x80] sm:$0xff]
          %v887 = vld [vmem:[#allocation2 + $0x88] sm:$0xff]
          %v888 = vld [vmem:[#allocation2 + $0x90] sm:$0xff]
          %v889 = vld [vmem:[#allocation2 + $0x98] sm:$0xff]
          %v890 = vld [vmem:[#allocation2 + $0xa0] sm:$0xff]
          %v891 = vld [vmem:[#allocation2 + $0xa8] sm:$0xff]
          %v892 = vld [vmem:[#allocation2 + $0xb0] sm:$0xff]
          %v893 = vld [vmem:[#allocation2 + $0xb8] sm:$0xff]
          %v894 = vld [vmem:[#allocation2 + $0xc0] sm:$0xff]
          %v895 = vld [vmem:[#allocation2 + $0xc8] sm:$0xff]
          %v896 = vld [vmem:[#allocation2 + $0xd0] sm:$0xff]
          %v897 = vld [vmem:[#allocation2 + $0xd8] sm:$0xff]
          %v898 = vld [vmem:[#allocation2 + $0xe0] sm:$0xff]
          %v899 = vld [vmem:[#allocation2 + $0xe8] sm:$0xff]
          %v900 = vld [vmem:[#allocation2 + $0xf0] sm:$0xff]
          %v901 = vld [vmem:[#allocation2 + $0xf8] sm:$0xff]
          %v902 = vld [vmem:[#allocation2 + $0x100] sm:$0xff]
          %v903 = vld [vmem:[#allocation2 + $0x108] sm:$0xff]
          %v904 = vld [vmem:[#allocation2 + $0x110] sm:$0xff]
          %v905 = vld [vmem:[#allocation2 + $0x118] sm:$0xff]
          %v906 = vld [vmem:[#allocation2 + $0x120] sm:$0xff]
          %v907 = vld [vmem:[#allocation2 + $0x128] sm:$0xff]
          %v908 = vld [vmem:[#allocation2 + $0x130] sm:$0xff]
          %v909 = vld [vmem:[#allocation2 + $0x138] sm:$0xff]
          %v910 = vld [vmem:[#allocation2 + $0x140] sm:$0xff]
          %v911 = vld [vmem:[#allocation2 + $0x148] sm:$0xff]
          %v912 = vld [vmem:[#allocation2 + $0x150] sm:$0xff]
          %v913 = vld [vmem:[#allocation2 + $0x158] sm:$0xff]
          %v914 = vld [vmem:[#allocation2 + $0x160] sm:$0xff]
          %v915 = vld [vmem:[#allocation2 + $0x168] sm:$0xff]
          %v916 = vld [vmem:[#allocation2 + $0x170] sm:$0xff]
          %v917 = vld [vmem:[#allocation2 + $0x178] sm:$0xff]
          %v918 = vld [vmem:[#allocation2 + $0x180] sm:$0xff]
          %v919 = vld [vmem:[#allocation2 + $0x188] sm:$0xff]
          %v920 = vld [vmem:[#allocation2 + $0x190] sm:$0xff]
          %v921 = vld [vmem:[#allocation2 + $0x198] sm:$0xff]
          %v922 = vld [vmem:[#allocation2 + $0x1a0] sm:$0xff]
          %v923 = vld [vmem:[#allocation2 + $0x1a8] sm:$0xff]
          %v924 = vld [vmem:[#allocation2 + $0x1b0] sm:$0xff]
          %v925 = vld [vmem:[#allocation2 + $0x1b8] sm:$0xff]
          %v926 = vld [vmem:[#allocation2 + $0x1c0] sm:$0xff]
          %v927 = vld [vmem:[#allocation2 + $0x1c8] sm:$0xff]
          %v928 = vld [vmem:[#allocation2 + $0x1d0] sm:$0xff]
          %v929 = vld [vmem:[#allocation2 + $0x1d8] sm:$0xff]
          %v930 = vld [vmem:[#allocation2 + $0x1e0] sm:$0xff]
          %v931 = vld [vmem:[#allocation2 + $0x1e8] sm:$0xff]
          %v932 = vld [vmem:[#allocation2 + $0x1f0] sm:$0xff]
          %v933 = vld [vmem:[#allocation2 + $0x1f8] sm:$0xff]
          %934 = vst [vmem:[%s215] sm:$0xff] %v870
          %935 = vst [vmem:[%s215 + $0x8] sm:$0xff] %v871
          %936 = vst [vmem:[%s215 + $0x10] sm:$0xff] %v872
          %937 = vst [vmem:[%s215 + $0x18] sm:$0xff] %v873
          %938 = vst [vmem:[%s215 + $0x20] sm:$0xff] %v874
          %939 = vst [vmem:[%s215 + $0x28] sm:$0xff] %v875
          %940 = vst [vmem:[%s215 + $0x30] sm:$0xff] %v876
          %941 = vst [vmem:[%s215 + $0x38] sm:$0xff] %v877
          %942 = vst [vmem:[%s215 + $0x40] sm:$0xff] %v878
          %943 = vst [vmem:[%s215 + $0x48] sm:$0xff] %v879
          %944 = vst [vmem:[%s215 + $0x50] sm:$0xff] %v880
          %945 = vst [vmem:[%s215 + $0x58] sm:$0xff] %v881
          %946 = vst [vmem:[%s215 + $0x60] sm:$0xff] %v882
          %947 = vst [vmem:[%s215 + $0x68] sm:$0xff] %v883
          %948 = vst [vmem:[%s215 + $0x70] sm:$0xff] %v884
          %949 = vst [vmem:[%s215 + $0x78] sm:$0xff] %v885
          %950 = vst [vmem:[%s215 + $0x80] sm:$0xff] %v886
          %951 = vst [vmem:[%s215 + $0x88] sm:$0xff] %v887
          %952 = vst [vmem:[%s215 + $0x90] sm:$0xff] %v888
          %953 = vst [vmem:[%s215 + $0x98] sm:$0xff] %v889
          %954 = vst [vmem:[%s215 + $0xa0] sm:$0xff] %v890
          %955 = vst [vmem:[%s215 + $0xa8] sm:$0xff] %v891
          %956 = vst [vmem:[%s215 + $0xb0] sm:$0xff] %v892
          %957 = vst [vmem:[%s215 + $0xb8] sm:$0xff] %v893
          %958 = vst [vmem:[%s215 + $0xc0] sm:$0xff] %v894
          %959 = vst [vmem:[%s215 + $0xc8] sm:$0xff] %v895
          %960 = vst [vmem:[%s215 + $0xd0] sm:$0xff] %v896
          %961 = vst [vmem:[%s215 + $0xd8] sm:$0xff] %v897
          %962 = vst [vmem:[%s215 + $0xe0] sm:$0xff] %v898
          %963 = vst [vmem:[%s215 + $0xe8] sm:$0xff] %v899
          %964 = vst [vmem:[%s215 + $0xf0] sm:$0xff] %v900
          %965 = vst [vmem:[%s215 + $0xf8] sm:$0xff] %v901
          %966 = vst [vmem:[%s215 + $0x100] sm:$0xff] %v902
          %967 = vst [vmem:[%s215 + $0x108] sm:$0xff] %v903
          %968 = vst [vmem:[%s215 + $0x110] sm:$0xff] %v904
          %969 = vst [vmem:[%s215 + $0x118] sm:$0xff] %v905
          %970 = vst [vmem:[%s215 + $0x120] sm:$0xff] %v906
          %971 = vst [vmem:[%s215 + $0x128] sm:$0xff] %v907
          %972 = vst [vmem:[%s215 + $0x130] sm:$0xff] %v908
          %973 = vst [vmem:[%s215 + $0x138] sm:$0xff] %v909
          %974 = vst [vmem:[%s215 + $0x140] sm:$0xff] %v910
          %975 = vst [vmem:[%s215 + $0x148] sm:$0xff] %v911
          %976 = vst [vmem:[%s215 + $0x150] sm:$0xff] %v912
          %977 = vst [vmem:[%s215 + $0x158] sm:$0xff] %v913
          %978 = vst [vmem:[%s215 + $0x160] sm:$0xff] %v914
          %979 = vst [vmem:[%s215 + $0x168] sm:$0xff] %v915
          %980 = vst [vmem:[%s215 + $0x170] sm:$0xff] %v916
          %981 = vst [vmem:[%s215 + $0x178] sm:$0xff] %v917
          %982 = vst [vmem:[%s215 + $0x180] sm:$0xff] %v918
          %983 = vst [vmem:[%s215 + $0x188] sm:$0xff] %v919
          %984 = vst [vmem:[%s215 + $0x190] sm:$0xff] %v920
          %985 = vst [vmem:[%s215 + $0x198] sm:$0xff] %v921
          %986 = vst [vmem:[%s215 + $0x1a0] sm:$0xff] %v922
          %987 = vst [vmem:[%s215 + $0x1a8] sm:$0xff] %v923
          %988 = vst [vmem:[%s215 + $0x1b0] sm:$0xff] %v924
          %989 = vst [vmem:[%s215 + $0x1b8] sm:$0xff] %v925
          %990 = vst [vmem:[%s215 + $0x1c0] sm:$0xff] %v926
          %991 = vst [vmem:[%s215 + $0x1c8] sm:$0xff] %v927
          %992 = vst [vmem:[%s215 + $0x1d0] sm:$0xff] %v928
          %993 = vst [vmem:[%s215 + $0x1d8] sm:$0xff] %v929
          %994 = vst [vmem:[%s215 + $0x1e0] sm:$0xff] %v930
          %995 = vst [vmem:[%s215 + $0x1e8] sm:$0xff] %v931
          %996 = vst [vmem:[%s215 + $0x1f0] sm:$0xff] %v932
          %997 = vst [vmem:[%s215 + $0x1f8] sm:$0xff] %v933
        $region44: #{tpu_custom_call.1} parent=27 // pred_fallthru
          _
        %s998 = sand.u32 %s105, 1
        %s999 = scalar_lea.sflag [#allocation5], %s998
        %s1000 = sand.u32 %s105, 1
        %s1001 = smul.addr %s1000, 512
        %s1002 = scalar_lea.vmem [#allocation8], %s1001
        // Predicated region
        $region45: #{tpu_custom_call.1} parent=27 // pred_check
          %p1003 = pneg %p115
        $region46: #{tpu_custom_call.1} parent=27 // pred_check_branch
          %1005 = sbr.rel (%p1003) target = $region48
        $region47: #{tpu_custom_call.1} parent=27 // pred_region
          %s1006 = smul.u32 32, %s25
          %s1007 = smul.u32 2, %s26
          %s1009 = ssub.s32 8192, 8192
          %1010 = vsyncadd %s999, %s1009
          %s1011 = smul.addr %s1006, 2
          %s1012 = sadd.s32 %s1007, %s1011
          %s1013 = smul.addr %s1012, 128
          %s1014 = scalar_lea.hbm %s2, %s1013
          %s1015 = sshll.u32 %s1002, 4
          %s1016 = int_to_ptr.vmem [resolvable:$true] %s1015
          %1021 = dma.vmem_to_hbm [thread:$0]  %s1016, 8192, %s1014, %s999, 256, 256, 16
        $region48: #{tpu_custom_call.1} parent=27 // pred_fallthru
          _
      $region28: #{tpu_custom_call.1} parent=5 // pred_fallthru
        _
      %p1022 = scmp.le.s32.totalorder 2, %s15
      // Predicated region
      $region49: #{tpu_custom_call.1} parent=5 // pred_check
        %p1023 = pneg %p1022
      $region50: #{tpu_custom_call.1} parent=5 // pred_check_branch
        %1025 = sbr.rel (%p1023) target = $region52
      $region51: #{tpu_custom_call.1} parent=5 // pred_region
        %s1026 = ssub.s32 %s15, 2
        // Predicated region
        $region53: #{tpu_custom_call.1} parent=51 // pred_check
          %p1027 = pneg %p121
        $region54: #{tpu_custom_call.1} parent=51 // pred_check_branch
          %1029 = sbr.rel (%p1027) target = $region56
        $region55: #{tpu_custom_call.1} parent=51 // pred_region
          %s1030 = sand.u32 %s106, 1
          %s1031 = scalar_lea.sflag [#allocation5], %s1030
          %s1032 = sand.u32 %s106, 1
          %s1033 = smul.addr %s1032, 512
          %s1034 = scalar_lea.vmem [#allocation8], %s1033
          %1035 = dma.done %s1031, 8192
        $region56: #{tpu_custom_call.1} parent=51 // pred_fallthru
          _
      $region52: #{tpu_custom_call.1} parent=5 // pred_fallthru
        _
    $region6: #{tpu_custom_call.1} parent=1 // loop_footer
      %s19 = sadd.s32 1, %s15
    $region7: #{tpu_custom_call.1} parent=1 // loop_footer_branch
      %14 = sbr.rel target = $region3
    $region8: #{tpu_custom_call.1} parent=1 // loop_exit
      _
    %1036 = vsyncpa [#allocation4], 1
    %s1037 = scalar_lea.sflag [#allocation4], 1
    %1038 = vsyncpa %s1037, 1
    %1039 = vsyncpa [#allocation7], 1
    %1040 = vsyncpa [#allocation5], 1
    %s1041 = scalar_lea.sflag [#allocation5], 1
    %1042 = vsyncpa %s1041, 1

</llo_original>
